<compile_context>
chip_gen: v7x
topology: tpu7x:2x2x1
jax: 0.10.0
libtpu: 0.0.40
codegen_flags: <defaults>
</compile_context>

<pallas_src>
import functools

import jax
import jax.numpy as jnp
from jax.experimental import pallas as pl
from jax.experimental.pallas import tpu as pltpu

LANES = 128


def _sublane_multiple(dtype) -> int:
    # f32 -> 8, bf16/fp16 -> 16, int8/fp8 -> 32 (sublane packing).
    itemsize = jnp.dtype(dtype).itemsize
    return max(8, 32 // max(1, itemsize))


def _dice_partials_kernel(x_ref, t_ref, out_ref, *, tile_rows: int,
                          last_rows: int, need_mask: bool):
    """Per-block partials, out block (1, 2, 128):
         row 0: sum over sublanes of sigmoid(x) * t     (numerator partial)
         row 1: sum over sublanes of sigmoid(x) + t     (denominator partial)
    Only sublane (VPU) reductions in-kernel; the tiny cross-lane reduction of
    the (grid, 2, 128) partials happens once in plain JAX outside.
    """
    # Cast in-kernel (inputs DMA'd in their native dtype).
    p = jax.nn.sigmoid(x_ref[...].astype(jnp.float32))
    t = t_ref[...].astype(jnp.float32)

    def write(pv, tv):
        num = jnp.sum(pv * tv, axis=0, keepdims=True)      # (1, 128)
        den = jnp.sum(pv + tv, axis=0, keepdims=True)      # (1, 128)
        out_ref[0] = jnp.concatenate([num, den], axis=0)   # (2, 128)

    if need_mask:
        i = pl.program_id(0)
        last = pl.num_programs(0) - 1

        @pl.when(i != last)
        def _():
            # Fast path: every element of the block is valid.
            write(p, t)

        @pl.when(i == last)
        def _():
            # Only the row overhang of the final block needs masking (the
            # <128-element lane tail is handled in plain JAX outside). Keep
            # it a select so NaNs from stale VMEM rows cannot propagate.
            row_iota = jax.lax.broadcasted_iota(jnp.int32, (tile_rows, LANES), 0)
            m = row_iota < last_rows
            write(jnp.where(m, p, 0.0), jnp.where(m, t, 0.0))
    else:
        write(p, t)


def dice_loss(inputs: jax.Array, targets: jax.Array, smooth: float = 1.0,
              tile_rows: int = 4096) -> jax.Array:
    """Equivalent of DiceLoss.forward(inputs, targets, smooth)."""
    x = inputs.reshape(-1)
    t = targets.reshape(-1)
    n = int(x.shape[0])

    rows = n // LANES
    n_main = rows * LANES
    tail = n - n_main

    # Ragged <128-element tail: negligible compute in plain JAX, and it lets
    # us skip the full-array jnp.pad copy entirely.
    if tail:
        xt = jax.nn.sigmoid(x[n_main:].astype(jnp.float32))
        tt = t[n_main:].astype(jnp.float32)
        tail_num = jnp.sum(xt * tt)
        tail_den = jnp.sum(xt) + jnp.sum(tt)
    else:
        tail_num = jnp.float32(0.0)
        tail_den = jnp.float32(0.0)

    if rows == 0:
        intersection = tail_num
        denom = tail_den
    else:
        x2 = x[:n_main].reshape(rows, LANES)
        t2 = t[:n_main].reshape(rows, LANES)

        mult = max(_sublane_multiple(x2.dtype), _sublane_multiple(t2.dtype))
        if rows <= tile_rows:
            # Single block equal to the full array dims: always a legal
            # block shape, even when rows isn't a sublane-packing multiple.
            tile = rows
        else:
            tile = max((tile_rows // mult) * mult, mult)
        grid = (rows + tile - 1) // tile
        last_rows = rows - (grid - 1) * tile
        need_mask = last_rows != tile

        bytes_accessed = (n_main * (x2.dtype.itemsize + t2.dtype.itemsize)
                          + grid * 2 * LANES * 4)

        out = pl.pallas_call(
            functools.partial(_dice_partials_kernel, tile_rows=tile,
                              last_rows=last_rows, need_mask=need_mask),
            out_shape=jax.ShapeDtypeStruct((grid, 2, LANES), jnp.float32),
            grid_spec=pltpu.PrefetchScalarGridSpec(
                num_scalar_prefetch=0,
                grid=(grid,),
                in_specs=[
                    pl.BlockSpec((tile, LANES), lambda i: (i, 0)),
                    pl.BlockSpec((tile, LANES), lambda i: (i, 0)),
                ],
                out_specs=pl.BlockSpec((1, 2, LANES), lambda i: (i, 0, 0)),
            ),
            compiler_params=pltpu.CompilerParams(
                dimension_semantics=("parallel",)),
            cost_estimate=pl.CostEstimate(
                flops=4 * n_main,
                transcendentals=n_main,
                bytes_accessed=bytes_accessed),
        )(x2, t2)

        sums = jnp.sum(out, axis=(0, 2))   # (2,): [intersection, p.sum+t.sum]
        intersection = sums[0] + tail_num
        denom = sums[1] + tail_den

    dice = (2.0 * intersection + smooth) / (denom + smooth)
    return 1.0 - dice


def _dice_loss_ref(inputs, targets, smooth=1.0):
    p = jax.nn.sigmoid(inputs.reshape(-1).astype(jnp.float32))
    t = targets.reshape(-1).astype(jnp.float32)
    inter = jnp.sum(p * t)
    dice = (2.0 * inter + smooth) / (jnp.sum(p) + jnp.sum(t) + smooth)
    return 1.0 - dice


if __name__ == "__main__":
    key = jax.random.PRNGKey(0)
    k1, k2 = jax.random.split(key)
    # NCHW, small shapes: batch=2, channels=4, spatial=16x16
    inputs = jax.random.normal(k1, (2, 4, 16, 16), dtype=jnp.float32)
    targets = (jax.random.uniform(k2, (2, 4, 16, 16)) > 0.5).astype(jnp.float32)

    loss = dice_loss(inputs, targets, smooth=1.0)
    jax.block_until_ready(loss)

    ref = _dice_loss_ref(inputs, targets, smooth=1.0)
    assert jnp.allclose(loss, ref, atol=1e-5, rtol=1e-5), (loss, ref)
    print("KERNEL_OK")
</pallas_src>

<mosaic_0001>
module attributes {stable_mosaic.version = 11 : i64} {
  func.func @_dice_partials_kernel(%arg0: i32, %arg1: memref<16x128xf32, #tpu.memory_space<vmem>>, %arg2: memref<16x128xf32, #tpu.memory_space<vmem>>, %arg3: memref<1x2x128xf32, #tpu.memory_space<vmem>>) attributes {dimension_semantics = [#tpu.dimension_semantics<parallel>], iteration_bounds = array<i64: 1>, scalar_prefetch = 0 : i64, scratch_operands = 0 : i64, tpu.core_type = #tpu.core_type<tc>, window_params = [{transform_indices = @transform_0, window_bounds = array<i64: 16, 128>}, {transform_indices = @transform_1, window_bounds = array<i64: 16, 128>}, {transform_indices = @transform_2, window_bounds = array<i64: 1, 2, 128>}]} {
    %c0 = arith.constant 0 : index
    %c0_0 = arith.constant 0 : index
    %0 = vector.load %arg1[%c0, %c0_0] : memref<16x128xf32, #tpu.memory_space<vmem>>, vector<16x128xf32>
    %1 = arith.negf %0 : vector<16x128xf32>
    %2 = math.exp %1 : vector<16x128xf32>
    %cst = arith.constant 1.000000e+00 : f32
    %3 = vector.broadcast %cst : f32 to vector<16x128xf32>
    %4 = arith.addf %3, %2 : vector<16x128xf32>
    %5 = arith.divf %3, %4 : vector<16x128xf32>
    %c0_1 = arith.constant 0 : index
    %c0_2 = arith.constant 0 : index
    %6 = vector.load %arg2[%c0_1, %c0_2] : memref<16x128xf32, #tpu.memory_space<vmem>>, vector<16x128xf32>
    %7 = arith.mulf %5, %6 : vector<16x128xf32>
    %cst_3 = arith.constant dense<0.000000e+00> : vector<128xf32>
    %8 = vector.multi_reduction <add>, %7, %cst_3 [0] : vector<16x128xf32> to vector<128xf32>
    %9 = vector.shape_cast %8 : vector<128xf32> to vector<1x128xf32>
    %10 = arith.addf %5, %6 : vector<16x128xf32>
    %cst_4 = arith.constant dense<0.000000e+00> : vector<128xf32>
    %11 = vector.multi_reduction <add>, %10, %cst_4 [0] : vector<16x128xf32> to vector<128xf32>
    %12 = vector.shape_cast %11 : vector<128xf32> to vector<1x128xf32>
    %13 = tpu.concatenate %9, %12 in 0 : vector<1x128xf32>, vector<1x128xf32> -> vector<2x128xf32>
    %c0_5 = arith.constant 0 : index
    %c0_6 = arith.constant 0 : index
    %c0_7 = arith.constant 0 : index
    %14 = vector.load %arg3[%c0_5, %c0_6, %c0_7] : memref<1x2x128xf32, #tpu.memory_space<vmem>>, vector<1x2x128xf32>
    %15 = vector.shape_cast %14 : vector<1x2x128xf32> to vector<2x128xf32>
    %16 = vector.shape_cast %13 : vector<2x128xf32> to vector<1x2x128xf32>
    tpu.vector_store %arg3[%c0_5, %c0_6, %c0_7], %16 {strides = array<i32>} : memref<1x2x128xf32, #tpu.memory_space<vmem>>, vector<1x2x128xf32>,
    return
  }
  func.func @transform_0(%arg0: i32) -> (i32, i32) {
    %c0_i32 = arith.constant 0 : i32
    %c0_i32_0 = arith.constant 0 : i32
    return %arg0, %c0_i32 : i32, i32
  }
  func.func @transform_1(%arg0: i32) -> (i32, i32) {
    %c0_i32 = arith.constant 0 : i32
    %c0_i32_0 = arith.constant 0 : i32
    return %arg0, %c0_i32 : i32, i32
  }
  func.func @transform_2(%arg0: i32) -> (i32, i32, i32) {
    %c0_i32 = arith.constant 0 : i32
    %c0_i32_0 = arith.constant 0 : i32
    %c0_i32_1 = arith.constant 0 : i32
    return %arg0, %c0_i32, %c0_i32_0 : i32, i32, i32
  }
}

</mosaic_0001>

<llo_original>
// kernel: tpu_custom_call.1
$region0: #{tpu_custom_call.1}
  #allocation0 [shape = 'u32[]', space=smem, size = 0x4, offset = 0x4, fixed_abs, tag = 'smem constant byte address 0x4 - core index']
  #allocation1 [shape = 'u32[144,128]{1,0:T(1,128)}', space=vmem, size = 0x12000, scoped, tag = 'internal scratch']
  %s0 = inlined_call_operand.hbm [shape: f32[16,128], index: 0, kind: input, shape index: {}]
  %s1 = inlined_call_operand.hbm [shape: f32[16,128], index: 1, kind: input, shape index: {}]
  %s2 = inlined_call_operand.hbm [shape: f32[1,2,128], index: 2, kind: output, shape index: {}]
  %s3 = sld [smem:[#allocation0]]
  $region26: #{tpu_custom_call.1} parent=0
    _
  %s5 = ssub.s32 1, %s3
  %s6 = scalar_select 0, %s5, %s3
  $region1: #{tpu_custom_call.1} parent=0
    #allocation2 [shape = 'u8[8192]{0}', space=vmem, size = 0x2000, scoped, tag = 'input window, operand 0, single buffered']
    #allocation3 [shape = 's32[1]{0}', space=sflag, size = 0x4, scoped, tag = 'scoped memory for tpu_custom_call.1']
    #allocation4 [shape = 's32[1]{0}', space=sflag, size = 0x4, scoped, tag = 'scoped memory for tpu_custom_call.1']
    #allocation5 [shape = 'u8[8192]{0}', space=vmem, size = 0x2000, scoped, tag = 'input window, operand 1, single buffered']
    #allocation6 [shape = 's32[1]{0}', space=sflag, size = 0x4, scoped, tag = 'scoped memory for tpu_custom_call.1']
    #allocation7 [shape = 'u8[1024]{0}', space=vmem, size = 0x400, scoped, tag = 'output window, operand 0, single buffered']
    %7 = vsyncpa [#allocation3], 0
    %8 = vsyncpa [#allocation6], 0
    %9 = vsyncpa [#allocation4], 0
    // Predicated region
    $region2: #{tpu_custom_call.1} parent=1 // pred_check
      _
    $region3: #{tpu_custom_call.1} parent=1 // pred_check_branch
      %11 = sbr.rel (0) target = $region5
    $region4: #{tpu_custom_call.1} parent=1 // pred_region
      %s13 = ssub.s32 256, 256
      %14 = vsyncadd [#allocation3], %s13
      %s15 = sshll.u32 [#allocation2], 4
      %s16 = int_to_ptr.vmem [resolvable:$true] %s15
      %21 = dma.hbm_to_vmem [thread:$0]  %s0, 256, %s16, [#allocation3], 128, 128, 8
    $region5: #{tpu_custom_call.1} parent=1 // pred_fallthru
      _
    // Predicated region
    $region6: #{tpu_custom_call.1} parent=1 // pred_check
      _
    $region7: #{tpu_custom_call.1} parent=1 // pred_check_branch
      %23 = sbr.rel (0) target = $region9
    $region8: #{tpu_custom_call.1} parent=1 // pred_region
      %s25 = ssub.s32 256, 256
      %26 = vsyncadd [#allocation6], %s25
      %s27 = sshll.u32 [#allocation5], 4
      %s28 = int_to_ptr.vmem [resolvable:$true] %s27
      %33 = dma.hbm_to_vmem [thread:$0]  %s1, 256, %s28, [#allocation6], 128, 128, 8
    $region9: #{tpu_custom_call.1} parent=1 // pred_fallthru
      _
    // Predicated region
    $region10: #{tpu_custom_call.1} parent=1 // pred_check
      _
    $region11: #{tpu_custom_call.1} parent=1 // pred_check_branch
      %35 = sbr.rel (0) target = $region13
    $region12: #{tpu_custom_call.1} parent=1 // pred_region
      %36 = dma.done [#allocation3], 256
    $region13: #{tpu_custom_call.1} parent=1 // pred_fallthru
      _
    // Predicated region
    $region14: #{tpu_custom_call.1} parent=1 // pred_check
      _
    $region15: #{tpu_custom_call.1} parent=1 // pred_check_branch
      %38 = sbr.rel (0) target = $region17
    $region16: #{tpu_custom_call.1} parent=1 // pred_region
      %39 = dma.done [#allocation6], 256
    $region17: #{tpu_custom_call.1} parent=1 // pred_fallthru
      _
    %v40 = vld [vmem:[#allocation2] sm:$0xff]
    %v41 = vld [vmem:[#allocation2 + $0x8] sm:$0xff]
    %v42 = vxor.u32 %v40, 2147483648
    %v43 = vxor.u32 %v41, 2147483648
    %v44 = vmul.f32 %v42, 1.442695
    %v45 = vpow.pop %v44
    %v46 = vmul.f32 %v43, 1.442695
    %v47 = vpow.pop %v46
    %v48 = vadd.f32 %v45, 1.0
    %v49 = vadd.f32 %v47, 1.0
    %v50 = vrcp.pop %v48
    %v51 = vmul.f32 1.0, %v50
    %v52 = vrcp.pop %v49
    %v53 = vmul.f32 1.0, %v52
    %v54 = vld [vmem:[#allocation5] sm:$0xff]
    %v55 = vld [vmem:[#allocation5 + $0x8] sm:$0xff]
    %v56 = vmul.f32 %v51, %v54
    %v57 = vmul.f32 %v53, %v55
    %v58 = vadd.f32 %v56, %v57
    %v59 = vrot.slane %v58, 4
    %v60 = vadd.f32 %v58, %v59
    %v61 = vrot.slane %v60, 2
    %v62 = vadd.f32 %v60, %v61
    %v63 = vrot.slane %v62, 1
    %v64 = vadd.f32 %v62, %v63
    %v65 = vadd.f32 %v51, %v54
    %v66 = vadd.f32 %v53, %v55
    %v67 = vadd.f32 %v65, %v66
    %v68 = vrot.slane %v67, 4
    %v69 = vadd.f32 %v67, %v68
    %v70 = vrot.slane %v69, 2
    %v71 = vadd.f32 %v69, %v70
    %v72 = vrot.slane %v71, 1
    %v73 = vadd.f32 %v71, %v72
    %vm74 = vcmask 1040384
    %v75 = vsel %vm74, %v64, %v73
    %76 = vst [vmem:[#allocation7] sm:$0x3] %v75
    // Predicated region
    $region18: #{tpu_custom_call.1} parent=1 // pred_check
      _
    $region19: #{tpu_custom_call.1} parent=1 // pred_check_branch
      %78 = sbr.rel (0) target = $region21
    $region20: #{tpu_custom_call.1} parent=1 // pred_region
      %s80 = ssub.s32 32, 32
      %81 = vsyncadd [#allocation4], %s80
      %s83 = sshll.u32 [#allocation7], 4
      %s84 = int_to_ptr.vmem [resolvable:$true] %s83
      %86 = dma.vmem_to_hbm [thread:$0]  %s84, 32, %s2, [#allocation4]
    $region21: #{tpu_custom_call.1} parent=1 // pred_fallthru
      _
    // Predicated region
    $region22: #{tpu_custom_call.1} parent=1 // pred_check
      _
    $region23: #{tpu_custom_call.1} parent=1 // pred_check_branch
      %88 = sbr.rel (0) target = $region25
    $region24: #{tpu_custom_call.1} parent=1 // pred_region
      %89 = dma.done [#allocation4], 32
    $region25: #{tpu_custom_call.1} parent=1 // pred_fallthru
      _
    %90 = vsyncpa [#allocation3], 1
    %91 = vsyncpa [#allocation6], 1
    %92 = vsyncpa [#allocation4], 1

</llo_original>
